<compile_context>
chip_gen: v7x
topology: tpu7x:2x2x1
jax: 0.10.0
libtpu: 0.0.40
codegen_flags: <defaults>
</compile_context>

<pallas_src>
import jax
import jax.numpy as jnp
from jax.experimental import pallas as pl
from jax.experimental.pallas import tpu as pltpu

HIDDEN = 128
LANE = 128
SUBLANE = 8


def _round_up(x, m):
    return ((x + m - 1) // m) * m


def dqn_kernel(x_ref, w1_ref, b1_ref, w2_ref, b2_ref, w3_ref, b3_ref, o_ref):
    cdt = w1_ref.dtype  # compute dtype for the MXU (f32 or bf16); accum is f32.
    # Layer 1: Linear + ReLU (MXU matmul, VPU bias-add + max). K = real in_dim.
    h1 = jnp.dot(x_ref[...].astype(cdt), w1_ref[...],
                 preferred_element_type=jnp.float32)
    h1 = jnp.maximum(h1 + b1_ref[...], 0.0)
    # Layer 2: Linear + ReLU.
    h2 = jnp.dot(h1.astype(cdt), w2_ref[...],
                 preferred_element_type=jnp.float32)
    h2 = jnp.maximum(h2 + b2_ref[...], 0.0)
    # Layer 3: Linear (no activation). w3 is lane-padded to 128 in VMEM only;
    # store just the real out_dim columns (narrow output block -> minimal HBM
    # output bytes).
    out = jnp.dot(h2.astype(cdt), w3_ref[...],
                  preferred_element_type=jnp.float32)
    out_dim = o_ref.shape[-1]
    o_ref[...] = (out[:, :out_dim] + b3_ref[...]).astype(o_ref.dtype)


def dq_network_forward(x, params, *, block_batch=1024, compute_dtype=jnp.float32):
    """Fused 3-layer MLP forward in one pallas_call, tiled over the batch.

    x:      [batch, input_dim] float32
    params: w1[in,128], b1[1,128], w2[128,128], b2[1,128], w3[128,out], b3[1,out]
            (weights already transposed vs PyTorch's [out, in]).
    compute_dtype: dtype the matmul operands are cast to (f32 or bf16);
            accumulation / bias / ReLU stay f32.
    """
    w1, b1 = params["w1"], params["b1"]
    w2, b2 = params["w2"], params["b2"]
    w3, b3 = params["w3"], params["b3"]

    batch, in_dim = x.shape
    hidden = w1.shape[1]
    out_dim = w3.shape[1]
    out_p = _round_up(out_dim, LANE)  # lane-padded N for the layer-3 matmul only

    # Batch tile: multiple of 8 sublanes, capped by block_batch, and sized so
    # the grid has >= 2 steps whenever batch allows it (v7x has 2 TensorCores;
    # "parallel" semantics shards grid steps across them). No batch padding:
    # partial last block handled by Pallas (rows are independent).
    tb = max(min(int(block_batch), pl.cdiv(batch, 2)), 1)
    tb = _round_up(tb, SUBLANE)
    grid = (pl.cdiv(batch, tb),)

    cdt = jnp.dtype(compute_dtype)
    w1_c = w1.astype(cdt)
    w2_c = w2.astype(cdt)
    # One-time, tiny pad of w3 to a full 128-lane tile (kept VMEM-resident).
    w3_c = jnp.pad(w3, ((0, 0), (0, out_p - out_dim))).astype(cdt)

    # VMEM budget: double-buffered x / out tiles + resident weights/biases +
    # f32 activations (h1, h2, padded out), plus headroom. Fits easily within
    # v7x's 32 MiB scoped default even at tb = 2048.
    wsz = cdt.itemsize
    weight_bytes = wsz * (in_dim * hidden + hidden * hidden + hidden * out_p) \
        + 4 * (2 * hidden + out_dim)
    io_bytes = 4 * 2 * tb * (in_dim + out_dim)        # double-buffered x / out
    act_bytes = 4 * tb * (2 * hidden + out_p)         # h1, h2, padded out
    vmem_bytes = int(min(64 << 20,
                         weight_bytes + io_bytes + 2 * act_bytes + (8 << 20)))

    flops = 2 * batch * (in_dim * hidden + hidden * hidden + hidden * out_p)
    bytes_accessed = int(4 * (x.size + batch * out_dim) + weight_bytes)

    def resident(a):
        # Full array, same block every grid step -> stays VMEM-resident.
        return pl.BlockSpec(a.shape, lambda i: (0, 0))

    out = pl.pallas_call(
        dqn_kernel,
        out_shape=jax.ShapeDtypeStruct((batch, out_dim), jnp.float32),
        grid=grid,
        in_specs=[
            pl.BlockSpec((tb, in_dim), lambda i: (i, 0)),  # x: tiled over batch
            resident(w1_c), resident(b1),
            resident(w2_c), resident(b2),
            resident(w3_c), resident(b3),
        ],
        out_specs=pl.BlockSpec((tb, out_dim), lambda i: (i, 0)),
        compiler_params=pltpu.CompilerParams(
            dimension_semantics=("parallel",),
            vmem_limit_bytes=vmem_bytes,
        ),
        cost_estimate=pl.CostEstimate(
            flops=flops, transcendentals=0, bytes_accessed=bytes_accessed),
    )(x, w1_c, b1, w2_c, b2, w3_c, b3)
    return out


def init_params(key, input_dim, output_dim, hidden=HIDDEN):
    """PyTorch-style uniform(-1/sqrt(fan_in), 1/sqrt(fan_in)) init.

    Weights stored as [in, out] (transpose of torch's [out, in])."""
    ks = jax.random.split(key, 6)

    def linear(kw, kb, fan_in, fan_out):
        bound = 1.0 / jnp.sqrt(jnp.float32(fan_in))
        w = jax.random.uniform(kw, (fan_in, fan_out), jnp.float32, -bound, bound)
        b = jax.random.uniform(kb, (1, fan_out), jnp.float32, -bound, bound)
        return w, b

    w1, b1 = linear(ks[0], ks[1], input_dim, hidden)
    w2, b2 = linear(ks[2], ks[3], hidden, hidden)
    w3, b3 = linear(ks[4], ks[5], hidden, output_dim)
    return {"w1": w1, "b1": b1, "w2": w2, "b2": b2, "w3": w3, "b3": b3}


def dq_network_ref(x, p):
    h1 = jnp.maximum(x @ p["w1"] + p["b1"], 0.0)
    h2 = jnp.maximum(h1 @ p["w2"] + p["b2"], 0.0)
    return h2 @ p["w3"] + p["b3"]


if __name__ == "__main__":
    key = jax.random.PRNGKey(0)
    k_x, k_x2, k_p = jax.random.split(key, 3)

    batch, input_dim, output_dim = 8, 32, 8
    params = init_params(k_p, input_dim, output_dim)

    # Case 1: small batch, single grid step, f32 compute.
    x = jax.random.normal(k_x, (batch, input_dim), jnp.float32)
    y = jax.block_until_ready(dq_network_forward(x, params))
    y_ref = dq_network_ref(x, params)
    assert y.shape == (batch, output_dim)
    assert jnp.allclose(y, y_ref, atol=1e-5, rtol=1e-5), "mismatch vs JAX reference"

    # Case 2: multi-step grid with a partial last batch block (20 = 2*8 + 4).
    batch2 = 20
    x2 = jax.random.normal(k_x2, (batch2, input_dim), jnp.float32)
    y2 = jax.block_until_ready(dq_network_forward(x2, params, block_batch=8))
    y2_ref = dq_network_ref(x2, params)
    assert y2.shape == (batch2, output_dim)
    assert jnp.allclose(y2, y2_ref, atol=1e-5, rtol=1e-5), "mismatch (tiled) vs JAX reference"

    # Case 3: bf16 MXU path (f32 accumulation) — loose tolerance by design.
    y3 = jax.block_until_ready(
        dq_network_forward(x2, params, block_batch=8, compute_dtype=jnp.bfloat16))
    assert y3.shape == (batch2, output_dim)
    assert jnp.allclose(y3, y2_ref, atol=1e-1, rtol=1e-1), "mismatch (bf16) vs JAX reference"

    print("KERNEL_OK")
</pallas_src>

<mosaic_0001>
module attributes {stable_mosaic.version = 11 : i64} {
  func.func @dqn_kernel(%arg0: i32, %arg1: memref<8x32xf32, #tpu.memory_space<vmem>>, %arg2: memref<32x128xf32, #tpu.memory_space<vmem>>, %arg3: memref<1x128xf32, #tpu.memory_space<vmem>>, %arg4: memref<128x128xf32, #tpu.memory_space<vmem>>, %arg5: memref<1x128xf32, #tpu.memory_space<vmem>>, %arg6: memref<128x128xf32, #tpu.memory_space<vmem>>, %arg7: memref<1x8xf32, #tpu.memory_space<vmem>>, %arg8: memref<8x8xf32, #tpu.memory_space<vmem>>) attributes {dimension_semantics = [#tpu.dimension_semantics<parallel>], iteration_bounds = array<i64: 1>, scalar_prefetch = 0 : i64, scratch_operands = 0 : i64, tpu.core_type = #tpu.core_type<tc>, window_params = [{transform_indices = @transform_0, window_bounds = array<i64: 8, 32>}, {pipeline_mode = #tpu.pipeline_mode<synchronous>, transform_indices = @transform_1, window_bounds = array<i64: 32, 128>}, {pipeline_mode = #tpu.pipeline_mode<synchronous>, transform_indices = @transform_2, window_bounds = array<i64: 1, 128>}, {pipeline_mode = #tpu.pipeline_mode<synchronous>, transform_indices = @transform_3, window_bounds = array<i64: 128, 128>}, {pipeline_mode = #tpu.pipeline_mode<synchronous>, transform_indices = @transform_4, window_bounds = array<i64: 1, 128>}, {pipeline_mode = #tpu.pipeline_mode<synchronous>, transform_indices = @transform_5, window_bounds = array<i64: 128, 128>}, {pipeline_mode = #tpu.pipeline_mode<synchronous>, transform_indices = @transform_6, window_bounds = array<i64: 1, 8>}, {transform_indices = @transform_7, window_bounds = array<i64: 8, 8>}]} {
    %c0 = arith.constant 0 : index
    %c0_0 = arith.constant 0 : index
    %0 = vector.load %arg1[%c0, %c0_0] : memref<8x32xf32, #tpu.memory_space<vmem>>, vector<8x32xf32>
    %c0_1 = arith.constant 0 : index
    %c0_2 = arith.constant 0 : index
    %1 = vector.load %arg2[%c0_1, %c0_2] : memref<32x128xf32, #tpu.memory_space<vmem>>, vector<32x128xf32>
    %cst = arith.constant dense<0.000000e+00> : vector<8x128xf32>
    %2 = tpu.matmul %0, %1, %cst {dimension_numbers = #tpu.dot_dimension_numbers<[1], [0], [0], [1], [0, 0, 1, 1], [], []>} : vector<8x32xf32>, vector<32x128xf32>, vector<8x128xf32> -> vector<8x128xf32>
    %c0_3 = arith.constant 0 : index
    %c0_4 = arith.constant 0 : index
    %3 = vector.load %arg3[%c0_3, %c0_4] : memref<1x128xf32, #tpu.memory_space<vmem>>, vector<1x128xf32>
    %4 = vector.broadcast %3 : vector<1x128xf32> to vector<8x128xf32>
    %5 = arith.addf %2, %4 : vector<8x128xf32>
    %cst_5 = arith.constant 0.000000e+00 : f32
    %6 = vector.broadcast %cst_5 : f32 to vector<8x128xf32>
    %7 = arith.maximumf %5, %6 : vector<8x128xf32>
    %c0_6 = arith.constant 0 : index
    %c0_7 = arith.constant 0 : index
    %8 = vector.load %arg4[%c0_6, %c0_7] : memref<128x128xf32, #tpu.memory_space<vmem>>, vector<128x128xf32>
    %cst_8 = arith.constant dense<0.000000e+00> : vector<8x128xf32>
    %9 = tpu.matmul %7, %8, %cst_8 {dimension_numbers = #tpu.dot_dimension_numbers<[1], [0], [0], [1], [0, 0, 1, 1], [], []>} : vector<8x128xf32>, vector<128x128xf32>, vector<8x128xf32> -> vector<8x128xf32>
    %c0_9 = arith.constant 0 : index
    %c0_10 = arith.constant 0 : index
    %10 = vector.load %arg5[%c0_9, %c0_10] : memref<1x128xf32, #tpu.memory_space<vmem>>, vector<1x128xf32>
    %11 = vector.broadcast %10 : vector<1x128xf32> to vector<8x128xf32>
    %12 = arith.addf %9, %11 : vector<8x128xf32>
    %cst_11 = arith.constant 0.000000e+00 : f32
    %13 = vector.broadcast %cst_11 : f32 to vector<8x128xf32>
    %14 = arith.maximumf %12, %13 : vector<8x128xf32>
    %c0_12 = arith.constant 0 : index
    %c0_13 = arith.constant 0 : index
    %15 = vector.load %arg6[%c0_12, %c0_13] : memref<128x128xf32, #tpu.memory_space<vmem>>, vector<128x128xf32>
    %cst_14 = arith.constant dense<0.000000e+00> : vector<8x128xf32>
    %16 = tpu.matmul %14, %15, %cst_14 {dimension_numbers = #tpu.dot_dimension_numbers<[1], [0], [0], [1], [0, 0, 1, 1], [], []>} : vector<8x128xf32>, vector<128x128xf32>, vector<8x128xf32> -> vector<8x128xf32>
    %17 = vector.extract_strided_slice %16 {offsets = [0, 0], sizes = [8, 8], strides = [1, 1]} : vector<8x128xf32> to vector<8x8xf32>
    %c0_15 = arith.constant 0 : index
    %c0_16 = arith.constant 0 : index
    %18 = vector.load %arg7[%c0_15, %c0_16] : memref<1x8xf32, #tpu.memory_space<vmem>>, vector<1x8xf32>
    %19 = vector.broadcast %18 : vector<1x8xf32> to vector<8x8xf32>
    %20 = arith.addf %17, %19 : vector<8x8xf32>
    %c0_17 = arith.constant 0 : index
    %c0_18 = arith.constant 0 : index
    %21 = vector.load %arg8[%c0_17, %c0_18] : memref<8x8xf32, #tpu.memory_space<vmem>>, vector<8x8xf32>
    tpu.vector_store %arg8[%c0_17, %c0_18], %20 {strides = array<i32>} : memref<8x8xf32, #tpu.memory_space<vmem>>, vector<8x8xf32>,
    return
  }
  func.func @transform_0(%arg0: i32) -> (i32, i32) {
    %c0_i32 = arith.constant 0 : i32
    %c0_i32_0 = arith.constant 0 : i32
    return %arg0, %c0_i32 : i32, i32
  }
  func.func @transform_1(%arg0: i32) -> (i32, i32) {
    %c0_i32 = arith.constant 0 : i32
    %c0_i32_0 = arith.constant 0 : i32
    %c0_i32_1 = arith.constant 0 : i32
    return %c0_i32, %c0_i32_0 : i32, i32
  }
  func.func @transform_2(%arg0: i32) -> (i32, i32) {
    %c0_i32 = arith.constant 0 : i32
    %c0_i32_0 = arith.constant 0 : i32
    %c0_i32_1 = arith.constant 0 : i32
    return %c0_i32, %c0_i32_0 : i32, i32
  }
  func.func @transform_3(%arg0: i32) -> (i32, i32) {
    %c0_i32 = arith.constant 0 : i32
    %c0_i32_0 = arith.constant 0 : i32
    %c0_i32_1 = arith.constant 0 : i32
    return %c0_i32, %c0_i32_0 : i32, i32
  }
  func.func @transform_4(%arg0: i32) -> (i32, i32) {
    %c0_i32 = arith.constant 0 : i32
    %c0_i32_0 = arith.constant 0 : i32
    %c0_i32_1 = arith.constant 0 : i32
    return %c0_i32, %c0_i32_0 : i32, i32
  }
  func.func @transform_5(%arg0: i32) -> (i32, i32) {
    %c0_i32 = arith.constant 0 : i32
    %c0_i32_0 = arith.constant 0 : i32
    %c0_i32_1 = arith.constant 0 : i32
    return %c0_i32, %c0_i32_0 : i32, i32
  }
  func.func @transform_6(%arg0: i32) -> (i32, i32) {
    %c0_i32 = arith.constant 0 : i32
    %c0_i32_0 = arith.constant 0 : i32
    %c0_i32_1 = arith.constant 0 : i32
    return %c0_i32, %c0_i32_0 : i32, i32
  }
  func.func @transform_7(%arg0: i32) -> (i32, i32) {
    %c0_i32 = arith.constant 0 : i32
    %c0_i32_0 = arith.constant 0 : i32
    return %arg0, %c0_i32 : i32, i32
  }
}

</mosaic_0001>

<llo_original>
// kernel: tpu_custom_call.1
$region0: #{tpu_custom_call.1}
  #allocation0 [shape = 'u32[]', space=smem, size = 0x4, offset = 0x4, fixed_abs, tag = 'smem constant byte address 0x4 - core index']
  #allocation1 [shape = 'u32[144,128]{1,0:T(1,128)}', space=vmem, size = 0x12000, scoped, tag = 'internal scratch']
  %s0 = inlined_call_operand.hbm [shape: f32[8,32], index: 0, kind: input, shape index: {}]
  %s1 = inlined_call_operand.hbm [shape: f32[32,128], index: 1, kind: input, shape index: {}]
  %s2 = inlined_call_operand.vmem [shape: f32[1,128], index: 2, kind: input, shape index: {}]
  %s3 = inlined_call_operand.hbm [shape: f32[128,128], index: 3, kind: input, shape index: {}]
  %s4 = inlined_call_operand.vmem [shape: f32[1,128], index: 4, kind: input, shape index: {}]
  %s5 = inlined_call_operand.hbm [shape: f32[128,128], index: 5, kind: input, shape index: {}]
  %s6 = inlined_call_operand.vmem [shape: f32[1,8], index: 6, kind: input, shape index: {}]
  %s7 = inlined_call_operand.hbm [shape: f32[8,8], index: 7, kind: output, shape index: {}]
  %s8 = sld [smem:[#allocation0]]
  $region54: #{tpu_custom_call.1} parent=0
    _
  %s10 = ssub.s32 1, %s8
  %s11 = scalar_select 0, %s10, %s8
  $region1: #{tpu_custom_call.1} parent=0
    #allocation2 [shape = 'u8[4096]{0}', space=vmem, size = 0x1000, scoped, tag = 'input window, operand 0, single buffered']
    #allocation3 [shape = 's32[1]{0}', space=sflag, size = 0x4, scoped, tag = 'scoped memory for tpu_custom_call.1']
    #allocation4 [shape = 's32[1]{0}', space=sflag, size = 0x4, scoped, tag = 'scoped memory for tpu_custom_call.1']
    #allocation5 [shape = 'u8[16384]{0}', space=vmem, size = 0x4000, scoped, tag = 'input window, operand 1, single buffered']
    #allocation6 [shape = 's32[1]{0}', space=sflag, size = 0x4, scoped, tag = 'scoped memory for tpu_custom_call.1']
    #allocation7 [shape = 'u8[65536]{0}', space=vmem, size = 0x10000, scoped, tag = 'input window, operand 3, single buffered']
    #allocation8 [shape = 'u8[65536]{0}', space=vmem, size = 0x10000, scoped, tag = 'input window, operand 5, single buffered']
    #allocation9 [shape = 's32[1]{0}', space=sflag, size = 0x4, scoped, tag = 'scoped memory for tpu_custom_call.1']
    #allocation10 [shape = 'u8[4096]{0}', space=vmem, size = 0x1000, scoped, tag = 'output window, operand 0, single buffered']
    %12 = vsyncpa [#allocation3], 0
    %13 = vsyncpa [#allocation6], 0
    %14 = vsyncpa [#allocation9], 0
    %15 = vsyncpa [#allocation4], 0
    // Predicated region
    $region2: #{tpu_custom_call.1} parent=1 // pred_check
      _
    $region3: #{tpu_custom_call.1} parent=1 // pred_check_branch
      %17 = sbr.rel (0) target = $region5
    $region4: #{tpu_custom_call.1} parent=1 // pred_region
      %s19 = ssub.s32 128, 128
      %20 = vsyncadd [#allocation3], %s19
      %s22 = sshll.u32 [#allocation2], 4
      %s23 = int_to_ptr.vmem [resolvable:$true] %s22
      %25 = dma.hbm_to_vmem [thread:$0]  %s0, 128, %s23, [#allocation3]
    $region5: #{tpu_custom_call.1} parent=1 // pred_fallthru
      _
    // Predicated region
    $region6: #{tpu_custom_call.1} parent=1 // pred_check
      _
    $region7: #{tpu_custom_call.1} parent=1 // pred_check_branch
      %27 = sbr.rel (0) target = $region9
    $region8: #{tpu_custom_call.1} parent=1 // pred_region
      %s29 = ssub.s32 512, 512
      %30 = vsyncadd [#allocation6], %s29
      %s31 = sshll.u32 [#allocation5], 4
      %s32 = int_to_ptr.vmem [resolvable:$true] %s31
      %37 = dma.hbm_to_vmem [thread:$0]  %s1, 512, %s32, [#allocation6], 128, 128, 8
    $region9: #{tpu_custom_call.1} parent=1 // pred_fallthru
      _
    // Predicated region
    $region10: #{tpu_custom_call.1} parent=1 // pred_check
      _
    $region11: #{tpu_custom_call.1} parent=1 // pred_check_branch
      %39 = sbr.rel (0) target = $region13
    $region12: #{tpu_custom_call.1} parent=1 // pred_region
      _
    $region13: #{tpu_custom_call.1} parent=1 // pred_fallthru
      _
    // Predicated region
    $region14: #{tpu_custom_call.1} parent=1 // pred_check
      _
    $region15: #{tpu_custom_call.1} parent=1 // pred_check_branch
      %41 = sbr.rel (0) target = $region17
    $region16: #{tpu_custom_call.1} parent=1 // pred_region
      %s43 = ssub.s32 2048, 2048
      %44 = vsyncadd [#allocation6], %s43
      %s45 = sshll.u32 [#allocation7], 4
      %s46 = int_to_ptr.vmem [resolvable:$true] %s45
      %51 = dma.hbm_to_vmem [thread:$0]  %s3, 2048, %s46, [#allocation6], 128, 128, 8
    $region17: #{tpu_custom_call.1} parent=1 // pred_fallthru
      _
    // Predicated region
    $region18: #{tpu_custom_call.1} parent=1 // pred_check
      _
    $region19: #{tpu_custom_call.1} parent=1 // pred_check_branch
      %53 = sbr.rel (0) target = $region21
    $region20: #{tpu_custom_call.1} parent=1 // pred_region
      _
    $region21: #{tpu_custom_call.1} parent=1 // pred_fallthru
      _
    // Predicated region
    $region22: #{tpu_custom_call.1} parent=1 // pred_check
      _
    $region23: #{tpu_custom_call.1} parent=1 // pred_check_branch
      %55 = sbr.rel (0) target = $region25
    $region24: #{tpu_custom_call.1} parent=1 // pred_region
      %s57 = ssub.s32 2048, 2048
      %58 = vsyncadd [#allocation9], %s57
      %s59 = sshll.u32 [#allocation8], 4
      %s60 = int_to_ptr.vmem [resolvable:$true] %s59
      %65 = dma.hbm_to_vmem [thread:$0]  %s5, 2048, %s60, [#allocation9], 128, 128, 8
    $region25: #{tpu_custom_call.1} parent=1 // pred_fallthru
      _
    // Predicated region
    $region26: #{tpu_custom_call.1} parent=1 // pred_check
      _
    $region27: #{tpu_custom_call.1} parent=1 // pred_check_branch
      %67 = sbr.rel (0) target = $region29
    $region28: #{tpu_custom_call.1} parent=1 // pred_region
      _
    $region29: #{tpu_custom_call.1} parent=1 // pred_fallthru
      _
    // Predicated region
    $region30: #{tpu_custom_call.1} parent=1 // pred_check
      _
    $region31: #{tpu_custom_call.1} parent=1 // pred_check_branch
      %69 = sbr.rel (0) target = $region33
    $region32: #{tpu_custom_call.1} parent=1 // pred_region
      %70 = dma.done [#allocation3], 128
    $region33: #{tpu_custom_call.1} parent=1 // pred_fallthru
      _
    // Predicated region
    $region34: #{tpu_custom_call.1} parent=1 // pred_check
      _
    $region35: #{tpu_custom_call.1} parent=1 // pred_check_branch
      %72 = sbr.rel (0) target = $region37
    $region36: #{tpu_custom_call.1} parent=1 // pred_region
      %73 = dma.done [#allocation6], 512
    $region37: #{tpu_custom_call.1} parent=1 // pred_fallthru
      _
    // Predicated region
    $region38: #{tpu_custom_call.1} parent=1 // pred_check
      _
    $region39: #{tpu_custom_call.1} parent=1 // pred_check_branch
      %75 = sbr.rel (0) target = $region41
    $region40: #{tpu_custom_call.1} parent=1 // pred_region
      %76 = dma.done [#allocation6], 2048
    $region41: #{tpu_custom_call.1} parent=1 // pred_fallthru
      _
    // Predicated region
    $region42: #{tpu_custom_call.1} parent=1 // pred_check
      _
    $region43: #{tpu_custom_call.1} parent=1 // pred_check_branch
      %78 = sbr.rel (0) target = $region45
    $region44: #{tpu_custom_call.1} parent=1 // pred_region
      %79 = dma.done [#allocation9], 2048
    $region45: #{tpu_custom_call.1} parent=1 // pred_fallthru
      _
    %v80 = vld [vmem:[#allocation2] sm:$0xff]
    %v81 = vld [vmem:[#allocation5] sm:$0xff]
    %v82 = vld [vmem:[#allocation5 + $0x8] sm:$0xff]
    %v83 = vld [vmem:[#allocation5 + $0x10] sm:$0xff]
    %v84 = vld [vmem:[#allocation5 + $0x18] sm:$0xff]
    %v85 = vld [vmem:[%s2] sm:$0x1]
    %v87 = vlaneseq
    %v88 = vshrl.u32 %v87, 7
    %v89 = vsub.s32 0, %v88
    %v90 = vrot.slane %v85, %v89
    %vm92 = vcmask 261120
    %v94 = vsel %vm92, %v80, 0
    %96 = vmatprep.subr.mxu0 0.0
    %97 = vmatpush1.msra.mxu0 %v81
    %98 = vmatprep.subr.mxu0 0.0
    %99 = vmatpush1.msra.mxu0 %v82
    %100 = vmatprep.subr.mxu0 0.0
    %101 = vmatpush1.msra.mxu0 %v83
    %102 = vmatprep.subr.mxu0 0.0
    %103 = vmatpush1.msra.mxu0 %v84
    %104 = vmatprep.subr.mxu0 0.0
    %105 = vmatpush1.msra.mxu0 0.0
    %106 = vmatprep.subr.mxu0 0.0
    %107 = vmatpush1.msra.mxu0 0.0
    %108 = vmatprep.subr.mxu0 0.0
    %109 = vmatpush1.msra.mxu0 0.0
    %110 = vmatprep.subr.mxu0 0.0
    %111 = vmatpush1.msra.mxu0 0.0
    %112 = vmatprep.subr.mxu0 0.0
    %113 = vmatpush1.msra.mxu0 0.0
    %114 = vmatprep.subr.mxu0 0.0
    %115 = vmatpush1.msra.mxu0 0.0
    %116 = vmatprep.subr.mxu0 0.0
    %117 = vmatpush1.msra.mxu0 0.0
    %118 = vmatprep.subr.mxu0 0.0
    %119 = vmatpush1.msra.mxu0 0.0
    %120 = vmatprep.subr.mxu0 0.0
    %121 = vmatpush1.msra.mxu0 0.0
    %122 = vmatprep.subr.mxu0 0.0
    %123 = vmatpush1.msra.mxu0 0.0
    %124 = vmatprep.subr.mxu0 0.0
    %125 = vmatpush1.msra.mxu0 0.0
    %126 = vmatprep.subr.mxu0 0.0
    %127 = vmatpush1.msra.mxu0 0.0
    %128 = vmatprep.subr.mxu0 0.0
    %129 = vmatpush1.msra.mxu0 0.0
    %130 = vmatprep.subr.mxu0 0.0
    %131 = vmatpush1.msra.mxu0 0.0
    %132 = vmatprep.subr.mxu0 0.0
    %133 = vmatpush1.msra.mxu0 0.0
    %134 = vmatprep.subr.mxu0 0.0
    %135 = vmatpush1.msra.mxu0 0.0
    %136 = vmatprep.subr.mxu0 0.0
    %137 = vmatpush1.msra.mxu0 0.0
    %138 = vmatprep.subr.mxu0 0.0
    %139 = vmatpush1.msra.mxu0 0.0
    %140 = vmatprep.subr.mxu0 0.0
    %141 = vmatpush1.msra.mxu0 0.0
    %142 = vmatprep.subr.mxu0 0.0
    %143 = vmatpush1.msra.mxu0 0.0
    %144 = vmatprep.subr.mxu0 0.0
    %145 = vmatpush1.msra.mxu0 0.0
    %146 = vmatprep.subr.mxu0 0.0
    %147 = vmatpush1.msra.mxu0 0.0
    %148 = vmatprep.subr.mxu0 0.0
    %149 = vmatpush1.msra.mxu0 0.0
    %150 = vmatprep.subr.mxu0 0.0
    %151 = vmatpush1.msra.mxu0 0.0
    %152 = vmatprep.subr.mxu0 0.0
    %153 = vmatpush1.msra.mxu0 0.0
    %154 = vmatprep.subr.mxu0 0.0
    %155 = vmatpush1.msra.mxu0 0.0
    %156 = vmatprep.subr.mxu0 0.0
    %157 = vmatpush1.msra.mxu0 0.0
    %158 = vmatprep.subr.mxu0 0.0
    %159 = vmatpush1.msra.mxu0 0.0
    %160 = vmatprep.mubr.f32.mxu0 0.0
    %161 = vmatmul.mubr.f32.gmra.mrb[0].mxu0 %v94
    %v162 = vpop.f32.mrb[0].mxu0
    %v163 = vadd.f32 %v90, %v162
    %v164 = vpop.f32.mrb[0].mxu0
    %165 = vdwg.mxu0
    %v166 = vmax.f32 %v163, 0.0
    %v167 = vld [vmem:[#allocation7] sm:$0xff]
    %v168 = vld [vmem:[#allocation7 + $0x8] sm:$0xff]
    %v169 = vld [vmem:[#allocation7 + $0x10] sm:$0xff]
    %v170 = vld [vmem:[#allocation7 + $0x18] sm:$0xff]
    %v171 = vld [vmem:[#allocation7 + $0x20] sm:$0xff]
    %v172 = vld [vmem:[#allocation7 + $0x28] sm:$0xff]
    %v173 = vld [vmem:[#allocation7 + $0x30] sm:$0xff]
    %v174 = vld [vmem:[#allocation7 + $0x38] sm:$0xff]
    %v175 = vld [vmem:[#allocation7 + $0x40] sm:$0xff]
    %v176 = vld [vmem:[#allocation7 + $0x48] sm:$0xff]
    %v177 = vld [vmem:[#allocation7 + $0x50] sm:$0xff]
    %v178 = vld [vmem:[#allocation7 + $0x58] sm:$0xff]
    %v179 = vld [vmem:[#allocation7 + $0x60] sm:$0xff]
    %v180 = vld [vmem:[#allocation7 + $0x68] sm:$0xff]
    %v181 = vld [vmem:[#allocation7 + $0x70] sm:$0xff]
    %v182 = vld [vmem:[#allocation7 + $0x78] sm:$0xff]
    %v183 = vld [vmem:[%s4] sm:$0x1]
    %v185 = vlaneseq
    %v186 = vshrl.u32 %v185, 7
    %v187 = vsub.s32 0, %v186
    %v188 = vrot.slane %v183, %v187
    %190 = vmatprep.subr.mxu0 0.0
    %191 = vmatpush1.msra.mxu0 %v167
    %192 = vmatprep.subr.mxu0 0.0
    %193 = vmatpush1.msra.mxu0 %v168
    %194 = vmatprep.subr.mxu0 0.0
    %195 = vmatpush1.msra.mxu0 %v169
    %196 = vmatprep.subr.mxu0 0.0
    %197 = vmatpush1.msra.mxu0 %v170
    %198 = vmatprep.subr.mxu0 0.0
    %199 = vmatpush1.msra.mxu0 %v171
    %200 = vmatprep.subr.mxu0 0.0
    %201 = vmatpush1.msra.mxu0 %v172
    %202 = vmatprep.subr.mxu0 0.0
    %203 = vmatpush1.msra.mxu0 %v173
    %204 = vmatprep.subr.mxu0 0.0
    %205 = vmatpush1.msra.mxu0 %v174
    %206 = vmatprep.subr.mxu0 0.0
    %207 = vmatpush1.msra.mxu0 %v175
    %208 = vmatprep.subr.mxu0 0.0
    %209 = vmatpush1.msra.mxu0 %v176
    %210 = vmatprep.subr.mxu0 0.0
    %211 = vmatpush1.msra.mxu0 %v177
    %212 = vmatprep.subr.mxu0 0.0
    %213 = vmatpush1.msra.mxu0 %v178
    %214 = vmatprep.subr.mxu0 0.0
    %215 = vmatpush1.msra.mxu0 %v179
    %216 = vmatprep.subr.mxu0 0.0
    %217 = vmatpush1.msra.mxu0 %v180
    %218 = vmatprep.subr.mxu0 0.0
    %219 = vmatpush1.msra.mxu0 %v181
    %220 = vmatprep.subr.mxu0 0.0
    %221 = vmatpush1.msra.mxu0 %v182
    %222 = vmatprep.subr.mxu0 0.0
    %223 = vmatpush1.msra.mxu0 0.0
    %224 = vmatprep.subr.mxu0 0.0
    %225 = vmatpush1.msra.mxu0 0.0
    %226 = vmatprep.subr.mxu0 0.0
    %227 = vmatpush1.msra.mxu0 0.0
    %228 = vmatprep.subr.mxu0 0.0
    %229 = vmatpush1.msra.mxu0 0.0
    %230 = vmatprep.subr.mxu0 0.0
    %231 = vmatpush1.msra.mxu0 0.0
    %232 = vmatprep.subr.mxu0 0.0
    %233 = vmatpush1.msra.mxu0 0.0
    %234 = vmatprep.subr.mxu0 0.0
    %235 = vmatpush1.msra.mxu0 0.0
    %236 = vmatprep.subr.mxu0 0.0
    %237 = vmatpush1.msra.mxu0 0.0
    %238 = vmatprep.subr.mxu0 0.0
    %239 = vmatpush1.msra.mxu0 0.0
    %240 = vmatprep.subr.mxu0 0.0
    %241 = vmatpush1.msra.mxu0 0.0
    %242 = vmatprep.subr.mxu0 0.0
    %243 = vmatpush1.msra.mxu0 0.0
    %244 = vmatprep.subr.mxu0 0.0
    %245 = vmatpush1.msra.mxu0 0.0
    %246 = vmatprep.subr.mxu0 0.0
    %247 = vmatpush1.msra.mxu0 0.0
    %248 = vmatprep.subr.mxu0 0.0
    %249 = vmatpush1.msra.mxu0 0.0
    %250 = vmatprep.subr.mxu0 0.0
    %251 = vmatpush1.msra.mxu0 0.0
    %252 = vmatprep.subr.mxu0 0.0
    %253 = vmatpush1.msra.mxu0 0.0
    %254 = vmatprep.mubr.f32.mxu0 0.0
    %255 = vmatmul.mubr.f32.gmra.mrb[0].mxu0 %v166
    %v256 = vpop.f32.mrb[0].mxu0
    %v257 = vadd.f32 %v188, %v256
    %v258 = vpop.f32.mrb[0].mxu0
    %259 = vdwg.mxu0
    %v260 = vmax.f32 %v257, 0.0
    %v261 = vld [vmem:[#allocation8] sm:$0xff]
    %v262 = vld [vmem:[#allocation8 + $0x8] sm:$0xff]
    %v263 = vld [vmem:[#allocation8 + $0x10] sm:$0xff]
    %v264 = vld [vmem:[#allocation8 + $0x18] sm:$0xff]
    %v265 = vld [vmem:[#allocation8 + $0x20] sm:$0xff]
    %v266 = vld [vmem:[#allocation8 + $0x28] sm:$0xff]
    %v267 = vld [vmem:[#allocation8 + $0x30] sm:$0xff]
    %v268 = vld [vmem:[#allocation8 + $0x38] sm:$0xff]
    %v269 = vld [vmem:[#allocation8 + $0x40] sm:$0xff]
    %v270 = vld [vmem:[#allocation8 + $0x48] sm:$0xff]
    %v271 = vld [vmem:[#allocation8 + $0x50] sm:$0xff]
    %v272 = vld [vmem:[#allocation8 + $0x58] sm:$0xff]
    %v273 = vld [vmem:[#allocation8 + $0x60] sm:$0xff]
    %v274 = vld [vmem:[#allocation8 + $0x68] sm:$0xff]
    %v275 = vld [vmem:[#allocation8 + $0x70] sm:$0xff]
    %v276 = vld [vmem:[#allocation8 + $0x78] sm:$0xff]
    %277 = vmatprep.subr.mxu0 0.0
    %278 = vmatpush1.msra.mxu0 %v261
    %279 = vmatprep.subr.mxu0 0.0
    %280 = vmatpush1.msra.mxu0 %v262
    %281 = vmatprep.subr.mxu0 0.0
    %282 = vmatpush1.msra.mxu0 %v263
    %283 = vmatprep.subr.mxu0 0.0
    %284 = vmatpush1.msra.mxu0 %v264
    %285 = vmatprep.subr.mxu0 0.0
    %286 = vmatpush1.msra.mxu0 %v265
    %287 = vmatprep.subr.mxu0 0.0
    %288 = vmatpush1.msra.mxu0 %v266
    %289 = vmatprep.subr.mxu0 0.0
    %290 = vmatpush1.msra.mxu0 %v267
    %291 = vmatprep.subr.mxu0 0.0
    %292 = vmatpush1.msra.mxu0 %v268
    %293 = vmatprep.subr.mxu0 0.0
    %294 = vmatpush1.msra.mxu0 %v269
    %295 = vmatprep.subr.mxu0 0.0
    %296 = vmatpush1.msra.mxu0 %v270
    %297 = vmatprep.subr.mxu0 0.0
    %298 = vmatpush1.msra.mxu0 %v271
    %299 = vmatprep.subr.mxu0 0.0
    %300 = vmatpush1.msra.mxu0 %v272
    %301 = vmatprep.subr.mxu0 0.0
    %302 = vmatpush1.msra.mxu0 %v273
    %303 = vmatprep.subr.mxu0 0.0
    %304 = vmatpush1.msra.mxu0 %v274
    %305 = vmatprep.subr.mxu0 0.0
    %306 = vmatpush1.msra.mxu0 %v275
    %307 = vmatprep.subr.mxu0 0.0
    %308 = vmatpush1.msra.mxu0 %v276
    %309 = vmatprep.subr.mxu0 0.0
    %310 = vmatpush1.msra.mxu0 0.0
    %311 = vmatprep.subr.mxu0 0.0
    %312 = vmatpush1.msra.mxu0 0.0
    %313 = vmatprep.subr.mxu0 0.0
    %314 = vmatpush1.msra.mxu0 0.0
    %315 = vmatprep.subr.mxu0 0.0
    %316 = vmatpush1.msra.mxu0 0.0
    %317 = vmatprep.subr.mxu0 0.0
    %318 = vmatpush1.msra.mxu0 0.0
    %319 = vmatprep.subr.mxu0 0.0
    %320 = vmatpush1.msra.mxu0 0.0
    %321 = vmatprep.subr.mxu0 0.0
    %322 = vmatpush1.msra.mxu0 0.0
    %323 = vmatprep.subr.mxu0 0.0
    %324 = vmatpush1.msra.mxu0 0.0
    %325 = vmatprep.subr.mxu0 0.0
    %326 = vmatpush1.msra.mxu0 0.0
    %327 = vmatprep.subr.mxu0 0.0
    %328 = vmatpush1.msra.mxu0 0.0
    %329 = vmatprep.subr.mxu0 0.0
    %330 = vmatpush1.msra.mxu0 0.0
    %331 = vmatprep.subr.mxu0 0.0
    %332 = vmatpush1.msra.mxu0 0.0
    %333 = vmatprep.subr.mxu0 0.0
    %334 = vmatpush1.msra.mxu0 0.0
    %335 = vmatprep.subr.mxu0 0.0
    %336 = vmatpush1.msra.mxu0 0.0
    %337 = vmatprep.subr.mxu0 0.0
    %338 = vmatpush1.msra.mxu0 0.0
    %339 = vmatprep.subr.mxu0 0.0
    %340 = vmatpush1.msra.mxu0 0.0
    %341 = vmatprep.mubr.f32.mxu0 0.0
    %342 = vmatmul.mubr.f32.gmra.mrb[0].mxu0 %v260
    %v343 = vpop.f32.mrb[0].mxu0
    %v344 = vadd.f32 0.0, %v343
    %v345 = vpop.f32.mrb[0].mxu0
    %346 = vdwg.mxu0
    %v347 = vld [vmem:[%s6] sm:$0x1]
    %v349 = vlaneseq
    %v350 = vshrl.u32 %v349, 7
    %v351 = vsub.s32 0, %v350
    %v352 = vrot.slane %v347, %v351
    %v354 = vadd.f32 %v344, %v352
    %vm355 = vcmask 64512
    %356 = vst.msk [vmem:[#allocation10] sm:$0xff] %vm355, %v354
    // Predicated region
    $region46: #{tpu_custom_call.1} parent=1 // pred_check
      _
    $region47: #{tpu_custom_call.1} parent=1 // pred_check_branch
      %358 = sbr.rel (0) target = $region49
    $region48: #{tpu_custom_call.1} parent=1 // pred_region
      %s360 = ssub.s32 128, 128
      %361 = vsyncadd [#allocation4], %s360
      %s363 = sshll.u32 [#allocation10], 4
      %s364 = int_to_ptr.vmem [resolvable:$true] %s363
      %366 = dma.vmem_to_hbm [thread:$0]  %s364, 128, %s7, [#allocation4]
    $region49: #{tpu_custom_call.1} parent=1 // pred_fallthru
      _
    // Predicated region
    $region50: #{tpu_custom_call.1} parent=1 // pred_check
      _
    $region51: #{tpu_custom_call.1} parent=1 // pred_check_branch
      %368 = sbr.rel (0) target = $region53
    $region52: #{tpu_custom_call.1} parent=1 // pred_region
      %369 = dma.done [#allocation4], 128
    $region53: #{tpu_custom_call.1} parent=1 // pred_fallthru
      _
    %370 = vsyncpa [#allocation3], 1
    %371 = vsyncpa [#allocation6], 1
    %372 = vsyncpa [#allocation9], 1
    %373 = vsyncpa [#allocation4], 1

</llo_original>
